<compile_context>
chip_gen: v7x
topology: tpu7x:2x2x1
jax: 0.10.0
libtpu: 0.0.40
codegen_flags: <defaults>
</compile_context>

<pallas_src>
import jax
import jax.numpy as jnp
from jax import lax
from jax.experimental import pallas as pl
from jax.experimental.pallas import tpu as pltpu


# -----------------------------------------------------------------------------
# Kernel 1: hoisted input projection (one big matmul per direction).
#   gi_f = x @ Wih_f + (bih_f + [bhh_f_r, bhh_f_z, 0])
#   gi_b = x @ Wih_b + (bih_b + [bhh_b_r, bhh_b_z, 0])
# -----------------------------------------------------------------------------
def _input_proj_kernel(x_ref, wf_ref, bf_ref, wb_ref, bb_ref, gf_ref, gb_ref):
    x = x_ref[...]
    gf_ref[...] = (jnp.dot(x, wf_ref[...], preferred_element_type=jnp.float32)
                   + bf_ref[...])
    gb_ref[...] = (jnp.dot(x, wb_ref[...], preferred_element_type=jnp.float32)
                   + bb_ref[...])


def _pick_row_tile(n_rows):
    for cand in (512, 256, 128, 64, 32, 16, 8):
        if n_rows % cand == 0:
            return cand
    return n_rows  # falls back to full extent (valid: equals full array dim)


def _input_projection(emb2d, wih_f, bf, wih_b, bb):
    TB, H = emb2d.shape
    G = wih_f.shape[1]  # 3H
    row_tile = _pick_row_tile(TB)
    grid = (TB // row_tile,)
    out_shapes = (jax.ShapeDtypeStruct((TB, G), jnp.float32),
                  jax.ShapeDtypeStruct((TB, G), jnp.float32))
    return pl.pallas_call(
        _input_proj_kernel,
        out_shape=out_shapes,
        grid_spec=pltpu.PrefetchScalarGridSpec(
            num_scalar_prefetch=0,
            grid=grid,
            in_specs=[
                pl.BlockSpec((row_tile, H), lambda i: (i, 0)),
                pl.BlockSpec((H, G), lambda i: (0, 0)),
                pl.BlockSpec((1, G), lambda i: (0, 0)),
                pl.BlockSpec((H, G), lambda i: (0, 0)),
                pl.BlockSpec((1, G), lambda i: (0, 0)),
            ],
            out_specs=(pl.BlockSpec((row_tile, G), lambda i: (i, 0)),
                       pl.BlockSpec((row_tile, G), lambda i: (i, 0))),
        ),
        compiler_params=pltpu.CompilerParams(
            dimension_semantics=("parallel",),
            vmem_limit_bytes=48 * 1024 * 1024),
    )(emb2d, wih_f, bf, wih_b, bb)


# -----------------------------------------------------------------------------
# Kernel 2: fused bidirectional GRU recurrence, chunked over time.
# Grid step i processes forward-time chunk i AND backward-time chunk (n-1-i),
# walking the backward chunk in reverse local order, so both direction chains
# advance in their natural global order while streaming chunks via BlockSpec.
# Hidden state is carried across grid steps in VMEM scratch.
# -----------------------------------------------------------------------------
def _bigru_recurrence_kernel(gi_f_ref, gi_b_ref, mask_f_ref, mask_b_ref, h0_ref,
                             whh_f_ref, whh_b_ref, bhhn_f_ref, bhhn_b_ref,
                             out_f_ref, out_b_ref, hn_ref,
                             hf_scr, hb_scr):
    tc = gi_f_ref.shape[0]          # timesteps per chunk (static)
    H = hf_scr.shape[1]

    @pl.when(pl.program_id(0) == 0)
    def _():
        hf_scr[...] = h0_ref[0]
        hb_scr[...] = h0_ref[1]

    # hoisted: single vreg each, avoids per-iteration re-loads
    bhhn_f = bhhn_f_ref[...]        # (1, H)
    bhhn_b = bhhn_b_ref[...]

    def step(t, carry):
        tb = tc - 1 - t             # reverse local order for the backward chain

        hf = hf_scr[...]
        hb = hb_scr[...]

        # Only the recurrent projection stays inside the serial chain; the
        # weight operands are consumed straight from VMEM refs.
        gh_f = jnp.dot(hf, whh_f_ref[...], preferred_element_type=jnp.float32)
        gh_b = jnp.dot(hb, whh_b_ref[...], preferred_element_type=jnp.float32)

        gif = gi_f_ref[t]           # (B, 3H); bih + bhh(r,z) already folded in
        gib = gi_b_ref[tb]

        # PyTorch GRU gate order: r, z, n
        r_f = jax.nn.sigmoid(gif[:, 0:H] + gh_f[:, 0:H])
        z_f = jax.nn.sigmoid(gif[:, H:2 * H] + gh_f[:, H:2 * H])
        n_f = jnp.tanh(gif[:, 2 * H:3 * H] + r_f * (gh_f[:, 2 * H:3 * H] + bhhn_f))
        hf_new = (1.0 - z_f) * n_f + z_f * hf

        r_b = jax.nn.sigmoid(gib[:, 0:H] + gh_b[:, 0:H])
        z_b = jax.nn.sigmoid(gib[:, H:2 * H] + gh_b[:, H:2 * H])
        n_b = jnp.tanh(gib[:, 2 * H:3 * H] + r_b * (gh_b[:, 2 * H:3 * H] + bhhn_b))
        hb_new = (1.0 - z_b) * n_b + z_b * hb

        m_f = mask_f_ref[t] > 0.5   # (B, 1) -> broadcast over H
        m_b = mask_b_ref[tb] > 0.5

        hf_scr[...] = jnp.where(m_f, hf_new, hf)    # freeze state past length
        hb_scr[...] = jnp.where(m_b, hb_new, hb)
        out_f_ref[t] = jnp.where(m_f, hf_new, jnp.zeros_like(hf_new))
        out_b_ref[tb] = jnp.where(m_b, hb_new, jnp.zeros_like(hb_new))
        return carry

    lax.fori_loop(0, tc, step, 0, unroll=(2 if tc % 2 == 0 else 1))

    # Final hidden state: same resident output block every grid step; the value
    # from the last grid step is what gets written back.
    hn_ref[0] = hf_scr[...]
    hn_ref[1] = hb_scr[...]


def _pick_t_chunk(T, B, H, requested=None, budget_bytes=16 * 1024 * 1024):
    """Largest divisor of T whose double-buffered chunk payload fits the budget
    (sized conservatively so it also fits v7x's 64 MiB VMEM)."""
    if requested is not None:
        if T % requested != 0:
            raise ValueError("t_chunk must divide T")
        return requested
    bytes_per_t = (3 * H + 3 * H + 1 + 1 + H + H) * B * 4 * 2  # x2 double buffer
    max_chunk = max(1, budget_bytes // max(bytes_per_t, 1))
    best = 1
    for c in range(1, T + 1):
        if T % c == 0 and c <= max_chunk:
            best = c
    return best


# -----------------------------------------------------------------------------
# Wrapper: embedding lookup (glue), mask/bias preparation, two pallas_calls.
# -----------------------------------------------------------------------------
def encoder_rnn_forward(input_seq, input_lengths, params, hidden=None, t_chunk=None):
    """Equivalent of EncoderRNN.forward for n_layers=1."""
    T, B = input_seq.shape
    H = params["emb"].shape[1]

    # Embedding lookup (glue).
    # TODO(synk): fuse this gather into the projection kernel (scalar-prefetch
    # token ids + per-row DMA) to avoid materializing `embedded` in HBM.
    embedded = params["emb"][input_seq].astype(jnp.float32)        # (T, B, H)

    # Packed-sequence validity mask, (T, B, 1) — H× smaller than before.
    t_idx = jnp.arange(T, dtype=jnp.int32)
    mask = (t_idx[:, None] < input_lengths[None, :]).astype(jnp.float32)[:, :, None]

    if hidden is None:
        hidden = jnp.zeros((2, B, H), jnp.float32)

    # Bias folding: bih fully + bhh(r,z) into the hoisted projection; keep only
    # the n-gate bhh for the in-loop term r * (h@Whh_n + bhh_n).
    zero_n = jnp.zeros((1, H), jnp.float32)
    bf = params["bih_f"] + jnp.concatenate([params["bhh_f"][:, :2 * H], zero_n], axis=1)
    bb = params["bih_b"] + jnp.concatenate([params["bhh_b"][:, :2 * H], zero_n], axis=1)
    bhhn_f = params["bhh_f"][:, 2 * H:]
    bhhn_b = params["bhh_b"][:, 2 * H:]

    # ---- Pallas kernel 1: hoisted input projection ----
    gi_f2d, gi_b2d = _input_projection(
        embedded.reshape(T * B, H), params["wih_f"], bf, params["wih_b"], bb)
    gi_f = gi_f2d.reshape(T, B, 3 * H)
    gi_b = gi_b2d.reshape(T, B, 3 * H)

    # ---- Pallas kernel 2: fused bidirectional recurrence, time-chunked ----
    tc = _pick_t_chunk(T, B, H, t_chunk)
    nchunks = T // tc
    last = nchunks - 1

    def fwd_idx(i):
        return (i, 0, 0)

    def bwd_idx(i):
        return (last - i, 0, 0)

    def fixed3(i):
        return (0, 0, 0)

    def fixed2(i):
        return (0, 0)

    in_specs = [
        pl.BlockSpec((tc, B, 3 * H), fwd_idx),   # gi_f, forward chunk order
        pl.BlockSpec((tc, B, 3 * H), bwd_idx),   # gi_b, reverse chunk order
        pl.BlockSpec((tc, B, 1), fwd_idx),       # mask (fwd view)
        pl.BlockSpec((tc, B, 1), bwd_idx),       # mask (bwd view)
        pl.BlockSpec((2, B, H), fixed3),         # h0 (resident)
        pl.BlockSpec((H, 3 * H), fixed2),        # whh_f (resident)
        pl.BlockSpec((H, 3 * H), fixed2),        # whh_b (resident)
        pl.BlockSpec((1, H), fixed2),            # bhh_n fwd
        pl.BlockSpec((1, H), fixed2),            # bhh_n bwd
    ]
    out_specs = (
        pl.BlockSpec((tc, B, H), fwd_idx),       # forward-direction outputs
        pl.BlockSpec((tc, B, H), bwd_idx),       # backward-direction outputs
        pl.BlockSpec((2, B, H), fixed3),         # final hidden (resident)
    )
    out_shapes = (
        jax.ShapeDtypeStruct((T, B, H), jnp.float32),
        jax.ShapeDtypeStruct((T, B, H), jnp.float32),
        jax.ShapeDtypeStruct((2, B, H), jnp.float32),
    )

    # TODO(synk): on v7x, additionally split the batch across the two
    # TensorCores (batch grid axis marked "parallel"); the time axis must stay
    # "arbitrary" because the hidden state is carried in scratch across chunks.
    out_f, out_b, hn = pl.pallas_call(
        _bigru_recurrence_kernel,
        out_shape=out_shapes,
        grid_spec=pltpu.PrefetchScalarGridSpec(
            num_scalar_prefetch=0,
            grid=(nchunks,),
            in_specs=in_specs,
            out_specs=out_specs,
            scratch_shapes=[
                pltpu.VMEM((B, H), jnp.float32),   # forward hidden carry
                pltpu.VMEM((B, H), jnp.float32),   # backward hidden carry
            ]),
        compiler_params=pltpu.CompilerParams(
            dimension_semantics=("arbitrary",),
            vmem_limit_bytes=48 * 1024 * 1024),
    )(gi_f, gi_b, mask, mask, hidden,
      params["whh_f"], params["whh_b"], bhhn_f, bhhn_b)

    # Sum of the two directions (what the PyTorch module returns). Done in the
    # wrapper so each direction can stream its chunks in its natural order.
    outputs = out_f + out_b
    return outputs, hn


# -----------------------------------------------------------------------------
# Deterministic parameter init (shapes follow nn.Embedding + nn.GRU, n_layers=1).
# Weights stored pre-transposed as (in, 3H) so kernels do x @ W.
# (On v6e/v7x, storing these in bfloat16 with f32 accumulation halves VMEM/DMA.)
# -----------------------------------------------------------------------------
def init_params(key, vocab_size, hidden_size):
    H = hidden_size
    k = 1.0 / jnp.sqrt(jnp.float32(H))
    keys = jax.random.split(key, 9)
    u = lambda kk, shape: jax.random.uniform(kk, shape, jnp.float32, -k, k)
    return {
        "emb":   jax.random.normal(keys[0], (vocab_size, H), jnp.float32),
        "wih_f": u(keys[1], (H, 3 * H)),
        "whh_f": u(keys[2], (H, 3 * H)),
        "bih_f": u(keys[3], (1, 3 * H)),
        "bhh_f": u(keys[4], (1, 3 * H)),
        "wih_b": u(keys[5], (H, 3 * H)),
        "whh_b": u(keys[6], (H, 3 * H)),
        "bih_b": u(keys[7], (1, 3 * H)),
        "bhh_b": u(keys[8], (1, 3 * H)),
    }


# -----------------------------------------------------------------------------
# Pure-JAX reference (uses the unfolded PyTorch GRU formulas).
# -----------------------------------------------------------------------------
def _ref_forward(input_seq, input_lengths, params):
    T, B = input_seq.shape
    H = params["emb"].shape[1]
    embedded = params["emb"][input_seq]
    mask = (jnp.arange(T)[:, None] < input_lengths[None, :]).astype(jnp.float32)

    def cell(x, h, wih, whh, bih, bhh):
        gi = x @ wih + bih
        gh = h @ whh + bhh
        r = jax.nn.sigmoid(gi[:, :H] + gh[:, :H])
        z = jax.nn.sigmoid(gi[:, H:2 * H] + gh[:, H:2 * H])
        n = jnp.tanh(gi[:, 2 * H:] + r * gh[:, 2 * H:])
        return (1.0 - z) * n + z * h

    def run(direction_params, reverse):
        wih, whh, bih, bhh = direction_params
        ts = range(T - 1, -1, -1) if reverse else range(T)
        h = jnp.zeros((B, H), jnp.float32)
        outs = [None] * T
        for t in ts:
            m = mask[t][:, None]
            h_new = cell(embedded[t], h, wih, whh, bih, bhh)
            h = m * h_new + (1.0 - m) * h
            outs[t] = m * h_new
        return jnp.stack(outs, 0), h

    of, hf = run((params["wih_f"], params["whh_f"], params["bih_f"], params["bhh_f"]), False)
    ob, hb = run((params["wih_b"], params["whh_b"], params["bih_b"], params["bhh_b"]), True)
    return of + ob, jnp.stack([hf, hb], 0)


if __name__ == "__main__":
    T, B, H, VOCAB = 8, 4, 32, 20

    key = jax.random.PRNGKey(0)
    kp, ks = jax.random.split(key)
    params = init_params(kp, VOCAB, H)

    input_seq = jax.random.randint(ks, (T, B), 0, VOCAB, dtype=jnp.int32)
    # lengths sorted descending, as pack_padded_sequence requires
    input_lengths = jnp.array([8, 7, 5, 3], dtype=jnp.int32)

    # t_chunk=4 -> grid of 2 time chunks: exercises the cross-chunk hidden carry.
    outputs, hidden = encoder_rnn_forward(input_seq, input_lengths, params, t_chunk=4)
    jax.block_until_ready((outputs, hidden))

    ref_out, ref_hid = _ref_forward(input_seq, input_lengths, params)
    assert outputs.shape == (T, B, H) and hidden.shape == (2, B, H)
    assert jnp.allclose(outputs, ref_out, atol=1e-4, rtol=1e-4)
    assert jnp.allclose(hidden, ref_hid, atol=1e-4, rtol=1e-4)

    print("KERNEL_OK")
</pallas_src>

<mosaic_0001>
module attributes {stable_mosaic.version = 11 : i64} {
  func.func @_input_proj_kernel(%arg0: i32, %arg1: memref<32x32xf32, #tpu.memory_space<vmem>>, %arg2: memref<32x96xf32, #tpu.memory_space<vmem>>, %arg3: memref<1x96xf32, #tpu.memory_space<vmem>>, %arg4: memref<32x96xf32, #tpu.memory_space<vmem>>, %arg5: memref<1x96xf32, #tpu.memory_space<vmem>>, %arg6: memref<32x96xf32, #tpu.memory_space<vmem>>, %arg7: memref<32x96xf32, #tpu.memory_space<vmem>>) attributes {dimension_semantics = [#tpu.dimension_semantics<parallel>], iteration_bounds = array<i64: 1>, scalar_prefetch = 0 : i64, scratch_operands = 0 : i64, tpu.core_type = #tpu.core_type<tc>, window_params = [{transform_indices = @transform_0, window_bounds = array<i64: 32, 32>}, {pipeline_mode = #tpu.pipeline_mode<synchronous>, transform_indices = @transform_1, window_bounds = array<i64: 32, 96>}, {pipeline_mode = #tpu.pipeline_mode<synchronous>, transform_indices = @transform_2, window_bounds = array<i64: 1, 96>}, {pipeline_mode = #tpu.pipeline_mode<synchronous>, transform_indices = @transform_3, window_bounds = array<i64: 32, 96>}, {pipeline_mode = #tpu.pipeline_mode<synchronous>, transform_indices = @transform_4, window_bounds = array<i64: 1, 96>}, {transform_indices = @transform_5, window_bounds = array<i64: 32, 96>}, {transform_indices = @transform_6, window_bounds = array<i64: 32, 96>}]} {
    %c0 = arith.constant 0 : index
    %c0_0 = arith.constant 0 : index
    %0 = vector.load %arg1[%c0, %c0_0] : memref<32x32xf32, #tpu.memory_space<vmem>>, vector<32x32xf32>
    %c0_1 = arith.constant 0 : index
    %c0_2 = arith.constant 0 : index
    %1 = vector.load %arg2[%c0_1, %c0_2] : memref<32x96xf32, #tpu.memory_space<vmem>>, vector<32x96xf32>
    %cst = arith.constant dense<0.000000e+00> : vector<32x96xf32>
    %2 = tpu.matmul %0, %1, %cst {dimension_numbers = #tpu.dot_dimension_numbers<[1], [0], [0], [1], [0, 0, 1, 1], [], []>} : vector<32x32xf32>, vector<32x96xf32>, vector<32x96xf32> -> vector<32x96xf32>
    %c0_3 = arith.constant 0 : index
    %c0_4 = arith.constant 0 : index
    %3 = vector.load %arg3[%c0_3, %c0_4] : memref<1x96xf32, #tpu.memory_space<vmem>>, vector<1x96xf32>
    %4 = vector.broadcast %3 : vector<1x96xf32> to vector<32x96xf32>
    %5 = arith.addf %2, %4 : vector<32x96xf32>
    %c0_5 = arith.constant 0 : index
    %c0_6 = arith.constant 0 : index
    %6 = vector.load %arg6[%c0_5, %c0_6] : memref<32x96xf32, #tpu.memory_space<vmem>>, vector<32x96xf32>
    tpu.vector_store %arg6[%c0_5, %c0_6], %5 {strides = array<i32>} : memref<32x96xf32, #tpu.memory_space<vmem>>, vector<32x96xf32>,
    %c0_7 = arith.constant 0 : index
    %c0_8 = arith.constant 0 : index
    %7 = vector.load %arg4[%c0_7, %c0_8] : memref<32x96xf32, #tpu.memory_space<vmem>>, vector<32x96xf32>
    %cst_9 = arith.constant dense<0.000000e+00> : vector<32x96xf32>
    %8 = tpu.matmul %0, %7, %cst_9 {dimension_numbers = #tpu.dot_dimension_numbers<[1], [0], [0], [1], [0, 0, 1, 1], [], []>} : vector<32x32xf32>, vector<32x96xf32>, vector<32x96xf32> -> vector<32x96xf32>
    %c0_10 = arith.constant 0 : index
    %c0_11 = arith.constant 0 : index
    %9 = vector.load %arg5[%c0_10, %c0_11] : memref<1x96xf32, #tpu.memory_space<vmem>>, vector<1x96xf32>
    %10 = vector.broadcast %9 : vector<1x96xf32> to vector<32x96xf32>
    %11 = arith.addf %8, %10 : vector<32x96xf32>
    %c0_12 = arith.constant 0 : index
    %c0_13 = arith.constant 0 : index
    %12 = vector.load %arg7[%c0_12, %c0_13] : memref<32x96xf32, #tpu.memory_space<vmem>>, vector<32x96xf32>
    tpu.vector_store %arg7[%c0_12, %c0_13], %11 {strides = array<i32>} : memref<32x96xf32, #tpu.memory_space<vmem>>, vector<32x96xf32>,
    return
  }
  func.func @transform_0(%arg0: i32) -> (i32, i32) {
    %c0_i32 = arith.constant 0 : i32
    %c0_i32_0 = arith.constant 0 : i32
    return %arg0, %c0_i32 : i32, i32
  }
  func.func @transform_1(%arg0: i32) -> (i32, i32) {
    %c0_i32 = arith.constant 0 : i32
    %c0_i32_0 = arith.constant 0 : i32
    %c0_i32_1 = arith.constant 0 : i32
    return %c0_i32, %c0_i32_0 : i32, i32
  }
  func.func @transform_2(%arg0: i32) -> (i32, i32) {
    %c0_i32 = arith.constant 0 : i32
    %c0_i32_0 = arith.constant 0 : i32
    %c0_i32_1 = arith.constant 0 : i32
    return %c0_i32, %c0_i32_0 : i32, i32
  }
  func.func @transform_3(%arg0: i32) -> (i32, i32) {
    %c0_i32 = arith.constant 0 : i32
    %c0_i32_0 = arith.constant 0 : i32
    %c0_i32_1 = arith.constant 0 : i32
    return %c0_i32, %c0_i32_0 : i32, i32
  }
  func.func @transform_4(%arg0: i32) -> (i32, i32) {
    %c0_i32 = arith.constant 0 : i32
    %c0_i32_0 = arith.constant 0 : i32
    %c0_i32_1 = arith.constant 0 : i32
    return %c0_i32, %c0_i32_0 : i32, i32
  }
  func.func @transform_5(%arg0: i32) -> (i32, i32) {
    %c0_i32 = arith.constant 0 : i32
    %c0_i32_0 = arith.constant 0 : i32
    return %arg0, %c0_i32 : i32, i32
  }
  func.func @transform_6(%arg0: i32) -> (i32, i32) {
    %c0_i32 = arith.constant 0 : i32
    %c0_i32_0 = arith.constant 0 : i32
    return %arg0, %c0_i32 : i32, i32
  }
}

</mosaic_0001>

<llo_original>
// kernel: tpu_custom_call.1
$region0: #{tpu_custom_call.1}
  #allocation0 [shape = 'u32[]', space=smem, size = 0x4, offset = 0x4, fixed_abs, tag = 'smem constant byte address 0x4 - core index']
  #allocation1 [shape = 'u32[144,128]{1,0:T(1,128)}', space=vmem, size = 0x12000, scoped, tag = 'internal scratch']
  %s0 = inlined_call_operand.hbm [shape: f32[32,32], index: 0, kind: input, shape index: {}]
  %s1 = inlined_call_operand.hbm [shape: f32[32,96], index: 1, kind: input, shape index: {}]
  %s2 = inlined_call_operand.vmem [shape: f32[1,96], index: 2, kind: input, shape index: {}]
  %s3 = inlined_call_operand.hbm [shape: f32[32,96], index: 3, kind: input, shape index: {}]
  %s4 = inlined_call_operand.vmem [shape: f32[1,96], index: 4, kind: input, shape index: {}]
  %s5 = inlined_call_operand.hbm [shape: f32[32,96], index: 5, kind: output, shape index: {0}]
  %s6 = inlined_call_operand.hbm [shape: f32[32,96], index: 6, kind: output, shape index: {1}]
  %7 = xla_tuple %s5, %s6
  %s8 = sld [smem:[#allocation0]]
  $region50: #{tpu_custom_call.1} parent=0
    _
  %s10 = ssub.s32 1, %s8
  %s11 = scalar_select 0, %s10, %s8
  $region1: #{tpu_custom_call.1} parent=0
    #allocation2 [shape = 'u8[16384]{0}', space=vmem, size = 0x4000, scoped, tag = 'input window, operand 0, single buffered']
    #allocation3 [shape = 's32[1]{0}', space=sflag, size = 0x4, scoped, tag = 'scoped memory for tpu_custom_call.1']
    #allocation4 [shape = 's32[1]{0}', space=sflag, size = 0x4, scoped, tag = 'scoped memory for tpu_custom_call.1']
    #allocation5 [shape = 'u8[16384]{0}', space=vmem, size = 0x4000, scoped, tag = 'input window, operand 1, single buffered']
    #allocation6 [shape = 's32[1]{0}', space=sflag, size = 0x4, scoped, tag = 'scoped memory for tpu_custom_call.1']
    #allocation7 [shape = 'u8[16384]{0}', space=vmem, size = 0x4000, scoped, tag = 'input window, operand 3, single buffered']
    #allocation8 [shape = 'u8[16384]{0}', space=vmem, size = 0x4000, scoped, tag = 'output window, operand 0, single buffered']
    #allocation9 [shape = 'u8[16384]{0}', space=vmem, size = 0x4000, scoped, tag = 'output window, operand 1, single buffered']
    #allocation10 [shape = 's32[1]{0}', space=sflag, size = 0x4, scoped, tag = 'scoped memory for tpu_custom_call.1']
    %12 = vsyncpa [#allocation3], 0
    %13 = vsyncpa [#allocation6], 0
    %14 = vsyncpa [#allocation4], 0
    %15 = vsyncpa [#allocation10], 0
    // Predicated region
    $region2: #{tpu_custom_call.1} parent=1 // pred_check
      _
    $region3: #{tpu_custom_call.1} parent=1 // pred_check_branch
      %17 = sbr.rel (0) target = $region5
    $region4: #{tpu_custom_call.1} parent=1 // pred_region
      %s19 = ssub.s32 512, 512
      %20 = vsyncadd [#allocation3], %s19
      %s21 = sshll.u32 [#allocation2], 4
      %s22 = int_to_ptr.vmem [resolvable:$true] %s21
      %27 = dma.hbm_to_vmem [thread:$0]  %s0, 512, %s22, [#allocation3], 128, 128, 8
    $region5: #{tpu_custom_call.1} parent=1 // pred_fallthru
      _
    // Predicated region
    $region6: #{tpu_custom_call.1} parent=1 // pred_check
      _
    $region7: #{tpu_custom_call.1} parent=1 // pred_check_branch
      %29 = sbr.rel (0) target = $region9
    $region8: #{tpu_custom_call.1} parent=1 // pred_region
      %s31 = ssub.s32 512, 512
      %32 = vsyncadd [#allocation6], %s31
      %s33 = sshll.u32 [#allocation5], 4
      %s34 = int_to_ptr.vmem [resolvable:$true] %s33
      %39 = dma.hbm_to_vmem [thread:$0]  %s1, 512, %s34, [#allocation6], 128, 128, 8
    $region9: #{tpu_custom_call.1} parent=1 // pred_fallthru
      _
    // Predicated region
    $region10: #{tpu_custom_call.1} parent=1 // pred_check
      _
    $region11: #{tpu_custom_call.1} parent=1 // pred_check_branch
      %41 = sbr.rel (0) target = $region13
    $region12: #{tpu_custom_call.1} parent=1 // pred_region
      _
    $region13: #{tpu_custom_call.1} parent=1 // pred_fallthru
      _
    // Predicated region
    $region14: #{tpu_custom_call.1} parent=1 // pred_check
      _
    $region15: #{tpu_custom_call.1} parent=1 // pred_check_branch
      %43 = sbr.rel (0) target = $region17
    $region16: #{tpu_custom_call.1} parent=1 // pred_region
      %s45 = ssub.s32 512, 512
      %46 = vsyncadd [#allocation6], %s45
      %s47 = sshll.u32 [#allocation7], 4
      %s48 = int_to_ptr.vmem [resolvable:$true] %s47
      %53 = dma.hbm_to_vmem [thread:$0]  %s3, 512, %s48, [#allocation6], 128, 128, 8
    $region17: #{tpu_custom_call.1} parent=1 // pred_fallthru
      _
    // Predicated region
    $region18: #{tpu_custom_call.1} parent=1 // pred_check
      _
    $region19: #{tpu_custom_call.1} parent=1 // pred_check_branch
      %55 = sbr.rel (0) target = $region21
    $region20: #{tpu_custom_call.1} parent=1 // pred_region
      _
    $region21: #{tpu_custom_call.1} parent=1 // pred_fallthru
      _
    // Predicated region
    $region22: #{tpu_custom_call.1} parent=1 // pred_check
      _
    $region23: #{tpu_custom_call.1} parent=1 // pred_check_branch
      %57 = sbr.rel (0) target = $region25
    $region24: #{tpu_custom_call.1} parent=1 // pred_region
      %58 = dma.done [#allocation3], 512
    $region25: #{tpu_custom_call.1} parent=1 // pred_fallthru
      _
    // Predicated region
    $region26: #{tpu_custom_call.1} parent=1 // pred_check
      _
    $region27: #{tpu_custom_call.1} parent=1 // pred_check_branch
      %60 = sbr.rel (0) target = $region29
    $region28: #{tpu_custom_call.1} parent=1 // pred_region
      %61 = dma.done [#allocation6], 512
    $region29: #{tpu_custom_call.1} parent=1 // pred_fallthru
      _
    // Predicated region
    $region30: #{tpu_custom_call.1} parent=1 // pred_check
      _
    $region31: #{tpu_custom_call.1} parent=1 // pred_check_branch
      %63 = sbr.rel (0) target = $region33
    $region32: #{tpu_custom_call.1} parent=1 // pred_region
      %64 = dma.done [#allocation6], 512
    $region33: #{tpu_custom_call.1} parent=1 // pred_fallthru
      _
    %v65 = vld [vmem:[#allocation2] sm:$0xff]
    %v66 = vld [vmem:[#allocation2 + $0x8] sm:$0xff]
    %v67 = vld [vmem:[#allocation2 + $0x10] sm:$0xff]
    %v68 = vld [vmem:[#allocation2 + $0x18] sm:$0xff]
    %v69 = vld [vmem:[#allocation5] sm:$0xff]
    %v70 = vld [vmem:[#allocation5 + $0x8] sm:$0xff]
    %v71 = vld [vmem:[#allocation5 + $0x10] sm:$0xff]
    %v72 = vld [vmem:[#allocation5 + $0x18] sm:$0xff]
    %v73 = vld [vmem:[%s2] sm:$0x1]
    %v75 = vlaneseq
    %v76 = vshrl.u32 %v75, 7
    %v77 = vsub.s32 0, %v76
    %v78 = vrot.slane %v73, %v77
    %vm80 = vcmask 261120
    %v82 = vsel %vm80, %v65, 0
    %v85 = vsel %vm80, %v66, 0
    %v88 = vsel %vm80, %v67, 0
    %v91 = vsel %vm80, %v68, 0
    %93 = vmatprep.subr.mxu0 0.0
    %94 = vmatpush1.msra.mxu0 %v69
    %95 = vmatprep.subr.mxu0 0.0
    %96 = vmatpush1.msra.mxu0 %v70
    %97 = vmatprep.subr.mxu0 0.0
    %98 = vmatpush1.msra.mxu0 %v71
    %99 = vmatprep.subr.mxu0 0.0
    %100 = vmatpush1.msra.mxu0 %v72
    %101 = vmatprep.subr.mxu0 0.0
    %102 = vmatpush1.msra.mxu0 0.0
    %103 = vmatprep.subr.mxu0 0.0
    %104 = vmatpush1.msra.mxu0 0.0
    %105 = vmatprep.subr.mxu0 0.0
    %106 = vmatpush1.msra.mxu0 0.0
    %107 = vmatprep.subr.mxu0 0.0
    %108 = vmatpush1.msra.mxu0 0.0
    %109 = vmatprep.subr.mxu0 0.0
    %110 = vmatpush1.msra.mxu0 0.0
    %111 = vmatprep.subr.mxu0 0.0
    %112 = vmatpush1.msra.mxu0 0.0
    %113 = vmatprep.subr.mxu0 0.0
    %114 = vmatpush1.msra.mxu0 0.0
    %115 = vmatprep.subr.mxu0 0.0
    %116 = vmatpush1.msra.mxu0 0.0
    %117 = vmatprep.subr.mxu0 0.0
    %118 = vmatpush1.msra.mxu0 0.0
    %119 = vmatprep.subr.mxu0 0.0
    %120 = vmatpush1.msra.mxu0 0.0
    %121 = vmatprep.subr.mxu0 0.0
    %122 = vmatpush1.msra.mxu0 0.0
    %123 = vmatprep.subr.mxu0 0.0
    %124 = vmatpush1.msra.mxu0 0.0
    %125 = vmatprep.subr.mxu0 0.0
    %126 = vmatpush1.msra.mxu0 0.0
    %127 = vmatprep.subr.mxu0 0.0
    %128 = vmatpush1.msra.mxu0 0.0
    %129 = vmatprep.subr.mxu0 0.0
    %130 = vmatpush1.msra.mxu0 0.0
    %131 = vmatprep.subr.mxu0 0.0
    %132 = vmatpush1.msra.mxu0 0.0
    %133 = vmatprep.subr.mxu0 0.0
    %134 = vmatpush1.msra.mxu0 0.0
    %135 = vmatprep.subr.mxu0 0.0
    %136 = vmatpush1.msra.mxu0 0.0
    %137 = vmatprep.subr.mxu0 0.0
    %138 = vmatpush1.msra.mxu0 0.0
    %139 = vmatprep.subr.mxu0 0.0
    %140 = vmatpush1.msra.mxu0 0.0
    %141 = vmatprep.subr.mxu0 0.0
    %142 = vmatpush1.msra.mxu0 0.0
    %143 = vmatprep.subr.mxu0 0.0
    %144 = vmatpush1.msra.mxu0 0.0
    %145 = vmatprep.subr.mxu0 0.0
    %146 = vmatpush1.msra.mxu0 0.0
    %147 = vmatprep.subr.mxu0 0.0
    %148 = vmatpush1.msra.mxu0 0.0
    %149 = vmatprep.subr.mxu0 0.0
    %150 = vmatpush1.msra.mxu0 0.0
    %151 = vmatprep.subr.mxu0 0.0
    %152 = vmatpush1.msra.mxu0 0.0
    %153 = vmatprep.subr.mxu0 0.0
    %154 = vmatpush1.msra.mxu0 0.0
    %155 = vmatprep.subr.mxu0 0.0
    %156 = vmatpush1.msra.mxu0 0.0
    %157 = vmatprep.mubr.f32.mxu0 0.0
    %158 = vmatmul.mubr.f32.gmra.mrb[0].mxu0 %v82
    %v159 = vpop.f32.mrb[0].mxu0
    %v160 = vadd.f32 %v78, %v159
    %v161 = vpop.f32.mrb[0].mxu0
    %162 = vmatprep.mubr.f32.mxu0 0.0
    %163 = vmatmul.mubr.f32.gmra.mrb[0].mxu0 %v85
    %v164 = vpop.f32.mrb[0].mxu0
    %v165 = vadd.f32 %v78, %v164
    %v166 = vpop.f32.mrb[0].mxu0
    %167 = vmatprep.mubr.f32.mxu0 0.0
    %168 = vmatmul.mubr.f32.gmra.mrb[0].mxu0 %v88
    %v169 = vpop.f32.mrb[0].mxu0
    %v170 = vadd.f32 %v78, %v169
    %v171 = vpop.f32.mrb[0].mxu0
    %172 = vmatprep.mubr.f32.mxu0 0.0
    %173 = vmatmul.mubr.f32.gmra.mrb[0].mxu0 %v91
    %v174 = vpop.f32.mrb[0].mxu0
    %v175 = vadd.f32 %v78, %v174
    %v176 = vpop.f32.mrb[0].mxu0
    %177 = vdwg.mxu0
    %vm178 = vcmask 785408
    %179 = vst.msk [vmem:[#allocation8] sm:$0xff] %vm178, %v160
    %180 = vst.msk [vmem:[#allocation8 + $0x8] sm:$0xff] %vm178, %v165
    %181 = vst.msk [vmem:[#allocation8 + $0x10] sm:$0xff] %vm178, %v170
    %182 = vst.msk [vmem:[#allocation8 + $0x18] sm:$0xff] %vm178, %v175
    %v183 = vld [vmem:[#allocation7] sm:$0xff]
    %v184 = vld [vmem:[#allocation7 + $0x8] sm:$0xff]
    %v185 = vld [vmem:[#allocation7 + $0x10] sm:$0xff]
    %v186 = vld [vmem:[#allocation7 + $0x18] sm:$0xff]
    %v187 = vld [vmem:[%s4] sm:$0x1]
    %v189 = vlaneseq
    %v190 = vshrl.u32 %v189, 7
    %v191 = vsub.s32 0, %v190
    %v192 = vrot.slane %v187, %v191
    %194 = vmatprep.subr.mxu0 0.0
    %195 = vmatpush1.msra.mxu0 %v183
    %196 = vmatprep.subr.mxu0 0.0
    %197 = vmatpush1.msra.mxu0 %v184
    %198 = vmatprep.subr.mxu0 0.0
    %199 = vmatpush1.msra.mxu0 %v185
    %200 = vmatprep.subr.mxu0 0.0
    %201 = vmatpush1.msra.mxu0 %v186
    %202 = vmatprep.subr.mxu0 0.0
    %203 = vmatpush1.msra.mxu0 0.0
    %204 = vmatprep.subr.mxu0 0.0
    %205 = vmatpush1.msra.mxu0 0.0
    %206 = vmatprep.subr.mxu0 0.0
    %207 = vmatpush1.msra.mxu0 0.0
    %208 = vmatprep.subr.mxu0 0.0
    %209 = vmatpush1.msra.mxu0 0.0
    %210 = vmatprep.subr.mxu0 0.0
    %211 = vmatpush1.msra.mxu0 0.0
    %212 = vmatprep.subr.mxu0 0.0
    %213 = vmatpush1.msra.mxu0 0.0
    %214 = vmatprep.subr.mxu0 0.0
    %215 = vmatpush1.msra.mxu0 0.0
    %216 = vmatprep.subr.mxu0 0.0
    %217 = vmatpush1.msra.mxu0 0.0
    %218 = vmatprep.subr.mxu0 0.0
    %219 = vmatpush1.msra.mxu0 0.0
    %220 = vmatprep.subr.mxu0 0.0
    %221 = vmatpush1.msra.mxu0 0.0
    %222 = vmatprep.subr.mxu0 0.0
    %223 = vmatpush1.msra.mxu0 0.0
    %224 = vmatprep.subr.mxu0 0.0
    %225 = vmatpush1.msra.mxu0 0.0
    %226 = vmatprep.subr.mxu0 0.0
    %227 = vmatpush1.msra.mxu0 0.0
    %228 = vmatprep.subr.mxu0 0.0
    %229 = vmatpush1.msra.mxu0 0.0
    %230 = vmatprep.subr.mxu0 0.0
    %231 = vmatpush1.msra.mxu0 0.0
    %232 = vmatprep.subr.mxu0 0.0
    %233 = vmatpush1.msra.mxu0 0.0
    %234 = vmatprep.subr.mxu0 0.0
    %235 = vmatpush1.msra.mxu0 0.0
    %236 = vmatprep.subr.mxu0 0.0
    %237 = vmatpush1.msra.mxu0 0.0
    %238 = vmatprep.subr.mxu0 0.0
    %239 = vmatpush1.msra.mxu0 0.0
    %240 = vmatprep.subr.mxu0 0.0
    %241 = vmatpush1.msra.mxu0 0.0
    %242 = vmatprep.subr.mxu0 0.0
    %243 = vmatpush1.msra.mxu0 0.0
    %244 = vmatprep.subr.mxu0 0.0
    %245 = vmatpush1.msra.mxu0 0.0
    %246 = vmatprep.subr.mxu0 0.0
    %247 = vmatpush1.msra.mxu0 0.0
    %248 = vmatprep.subr.mxu0 0.0
    %249 = vmatpush1.msra.mxu0 0.0
    %250 = vmatprep.subr.mxu0 0.0
    %251 = vmatpush1.msra.mxu0 0.0
    %252 = vmatprep.subr.mxu0 0.0
    %253 = vmatpush1.msra.mxu0 0.0
    %254 = vmatprep.subr.mxu0 0.0
    %255 = vmatpush1.msra.mxu0 0.0
    %256 = vmatprep.subr.mxu0 0.0
    %257 = vmatpush1.msra.mxu0 0.0
    %258 = vmatprep.mubr.f32.mxu0 0.0
    %259 = vmatmul.mubr.f32.gmra.mrb[0].mxu0 %v82
    %v260 = vpop.f32.mrb[0].mxu0
    %v261 = vadd.f32 %v192, %v260
    %v262 = vpop.f32.mrb[0].mxu0
    %263 = vmatprep.mubr.f32.mxu0 0.0
    %264 = vmatmul.mubr.f32.gmra.mrb[0].mxu0 %v85
    %v265 = vpop.f32.mrb[0].mxu0
    %v266 = vadd.f32 %v192, %v265
    %v267 = vpop.f32.mrb[0].mxu0
    %268 = vmatprep.mubr.f32.mxu0 0.0
    %269 = vmatmul.mubr.f32.gmra.mrb[0].mxu0 %v88
    %v270 = vpop.f32.mrb[0].mxu0
    %v271 = vadd.f32 %v192, %v270
    %v272 = vpop.f32.mrb[0].mxu0
    %273 = vmatprep.mubr.f32.mxu0 0.0
    %274 = vmatmul.mubr.f32.gmra.mrb[0].mxu0 %v91
    %v275 = vpop.f32.mrb[0].mxu0
    %v276 = vadd.f32 %v192, %v275
    %v277 = vpop.f32.mrb[0].mxu0
    %278 = vdwg.mxu0
    %279 = vst.msk [vmem:[#allocation9] sm:$0xff] %vm178, %v261
    %280 = vst.msk [vmem:[#allocation9 + $0x8] sm:$0xff] %vm178, %v266
    %281 = vst.msk [vmem:[#allocation9 + $0x10] sm:$0xff] %vm178, %v271
    %282 = vst.msk [vmem:[#allocation9 + $0x18] sm:$0xff] %vm178, %v276
    // Predicated region
    $region34: #{tpu_custom_call.1} parent=1 // pred_check
      _
    $region35: #{tpu_custom_call.1} parent=1 // pred_check_branch
      %284 = sbr.rel (0) target = $region37
    $region36: #{tpu_custom_call.1} parent=1 // pred_region
      %s286 = ssub.s32 512, 512
      %287 = vsyncadd [#allocation4], %s286
      %s288 = sshll.u32 [#allocation8], 4
      %s289 = int_to_ptr.vmem [resolvable:$true] %s288
      %294 = dma.vmem_to_hbm [thread:$0]  %s289, 512, %s5, [#allocation4], 128, 128, 8
    $region37: #{tpu_custom_call.1} parent=1 // pred_fallthru
      _
    // Predicated region
    $region38: #{tpu_custom_call.1} parent=1 // pred_check
      _
    $region39: #{tpu_custom_call.1} parent=1 // pred_check_branch
      %296 = sbr.rel (0) target = $region41
    $region40: #{tpu_custom_call.1} parent=1 // pred_region
      %s298 = ssub.s32 512, 512
      %299 = vsyncadd [#allocation10], %s298
      %s300 = sshll.u32 [#allocation9], 4
      %s301 = int_to_ptr.vmem [resolvable:$true] %s300
      %306 = dma.vmem_to_hbm [thread:$0]  %s301, 512, %s6, [#allocation10], 128, 128, 8
    $region41: #{tpu_custom_call.1} parent=1 // pred_fallthru
      _
    // Predicated region
    $region42: #{tpu_custom_call.1} parent=1 // pred_check
      _
    $region43: #{tpu_custom_call.1} parent=1 // pred_check_branch
      %308 = sbr.rel (0) target = $region45
    $region44: #{tpu_custom_call.1} parent=1 // pred_region
      %309 = dma.done [#allocation4], 512
    $region45: #{tpu_custom_call.1} parent=1 // pred_fallthru
      _
    // Predicated region
    $region46: #{tpu_custom_call.1} parent=1 // pred_check
      _
    $region47: #{tpu_custom_call.1} parent=1 // pred_check_branch
      %311 = sbr.rel (0) target = $region49
    $region48: #{tpu_custom_call.1} parent=1 // pred_region
      %312 = dma.done [#allocation10], 512
    $region49: #{tpu_custom_call.1} parent=1 // pred_fallthru
      _
    %313 = vsyncpa [#allocation3], 1
    %314 = vsyncpa [#allocation6], 1
    %315 = vsyncpa [#allocation4], 1
    %316 = vsyncpa [#allocation10], 1

</llo_original>
